<compile_context>
chip_gen: v7x
topology: tpu7x:2x2x1
jax: 0.10.0
libtpu: 0.0.40
codegen_flags: <defaults>
</compile_context>

<pallas_src>
import functools

import jax
import jax.numpy as jnp
from jax import lax
from jax.experimental import pallas as pl
from jax.experimental.pallas import tpu as pltpu

IN_FEATURES = 32 * 32 * 3    # 3072
HIDDEN = 128                 # nn.Linear output features (full module width)
KEEP = 2                     # only columns 0,1 of the Linear output are live

USED_APIS = ['torch.Tensor.not_equal_', 'torch.Tensor.conj_physical_',
             'torch.sin', 'torch.Tensor.repeat_interleave', 'torch.Tensor.asin',
             'torch.arcsin', 'torch.arccos', 'torch.outer', 'torch.remainder',
             'torch.heaviside', 'torch.nn.functional.relu_']


def _fused_kernel(x_ref, w_ref, b_ref, out_ref):
    """Whole forward pass in one shot on the live 2 columns."""
    # (B, 3072) @ (3072, 2) on the MXU, f32 accumulation, fully VMEM-resident.
    h = jnp.dot(x_ref[...], w_ref[...], preferred_element_type=jnp.float32)
    h = h + b_ref[...]                               # Linear bias (broadcast (1,2))
    h = jnp.maximum(h, 0.0)                          # F.relu_
    # repeat_interleave(2, dim=1) + elementwise chain + MaxPool1d(2, 2) cancel,
    # so the chain is applied directly on the un-duplicated (B, 2) tile.
    h = jnp.arcsin(h)                                # torch.asin (NaN for h > 1)
    h = jnp.where(h != 0.5, 1.0, 0.0)                # .not_equal_(0.5) in-place
    h = jnp.sin(h)                                   # torch.sin
    h = jnp.arcsin(h)                                # torch.arcsin
    h = jnp.arccos(h)                                # torch.arccos
    # .conj_physical_() is the identity for real tensors.

    # torch.outer(h[:, 0], h[:, 1]) -> (B, B): rank-1 matmul of the two column
    # slices; the dot_general contraction handles the "transpose" of h[:, 1].
    outer = lax.dot_general(h[:, 0:1], h[:, 1:2], (((1,), (1,)), ((), ())),
                            preferred_element_type=jnp.float32)   # (B, B)

    r = jnp.remainder(outer, 2.0)                    # torch.remainder(x, 2)
    # torch.heaviside(r, r): 0 if r < 0, r (the "values" arg) if r == 0, 1 if r > 0
    out_ref[...] = jnp.where(r == 0.0, r, jnp.where(r > 0.0, 1.0, 0.0))


def _linear_relu_kernel(x_ref, w_ref, b_ref, h_ref):
    """Fallback kernel: only the (B,3072)@(3072,2) matmul + bias + ReLU."""
    h_ref[...] = jnp.maximum(
        jnp.dot(x_ref[...], w_ref[...], preferred_element_type=jnp.float32)
        + b_ref[...], 0.0)


@functools.lru_cache(maxsize=None)
def _build_forward(batch):
    """Build (once per batch size) a jitted (x, w2, b2) -> (B, B) callable."""
    x_spec = pl.BlockSpec((batch, IN_FEATURES), lambda i: (0, 0))
    w_spec = pl.BlockSpec((IN_FEATURES, KEEP), lambda i: (0, 0))
    b_spec = pl.BlockSpec((1, KEEP), lambda i: (0, 0))
    params = pltpu.CompilerParams(dimension_semantics=("arbitrary",))

    fused_cost = pl.CostEstimate(
        flops=2 * batch * IN_FEATURES * KEEP + 2 * batch * batch,
        transcendentals=4 * batch * KEEP,
        bytes_accessed=4 * (batch * IN_FEATURES + IN_FEATURES * KEEP
                            + KEEP + batch * batch),
    )

    fused_call = pl.pallas_call(
        _fused_kernel,
        out_shape=jax.ShapeDtypeStruct((batch, batch), jnp.float32),
        grid=(1,),
        in_specs=[x_spec, w_spec, b_spec],
        out_specs=pl.BlockSpec((batch, batch), lambda i: (0, 0)),
        compiler_params=params,
        cost_estimate=fused_cost,
    )

    def fused_fn(x, w2, b2):
        x2d = x.reshape(batch, IN_FEATURES).astype(jnp.float32)
        return fused_call(x2d, w2, b2)

    fused_jit = jax.jit(fused_fn)
    arg_shapes = (jax.ShapeDtypeStruct((batch, 3, 32, 32), jnp.float32),
                  jax.ShapeDtypeStruct((IN_FEATURES, KEEP), jnp.float32),
                  jax.ShapeDtypeStruct((1, KEEP), jnp.float32))
    try:
        # Resolve the fused-vs-fallback lowering question once, ahead of time.
        fused_jit.lower(*arg_shapes).compile()
        return fused_jit
    except Exception:
        # TODO(synk): arcsin/arccos (or the rank-1 dot) had no Mosaic lowering on
        # this jaxlib; keep the matmul+bias+ReLU hot path in Pallas and run the
        # tiny (B,2) tail + (B,B) outer in plain JAX (same semantics).
        lin_cost = pl.CostEstimate(
            flops=2 * batch * IN_FEATURES * KEEP,
            transcendentals=0,
            bytes_accessed=4 * (batch * IN_FEATURES + IN_FEATURES * KEEP
                                + KEEP + batch * KEEP),
        )
        lin_call = pl.pallas_call(
            _linear_relu_kernel,
            out_shape=jax.ShapeDtypeStruct((batch, KEEP), jnp.float32),
            grid=(1,),
            in_specs=[x_spec, w_spec, b_spec],
            out_specs=pl.BlockSpec((batch, KEEP), lambda i: (0, 0)),
            compiler_params=params,
            cost_estimate=lin_cost,
        )

        def fallback_fn(x, w2, b2):
            x2d = x.reshape(batch, IN_FEATURES).astype(jnp.float32)
            h = lin_call(x2d, w2, b2)                          # (B, 2)
            # repeat_interleave(2)/MaxPool1d(2,2) cancel -> chain on (B, 2).
            h = jnp.arcsin(h)                                  # torch.asin
            h = jnp.where(h != 0.5, 1.0, 0.0)                  # .not_equal_(0.5)
            h = jnp.arccos(jnp.arcsin(jnp.sin(h)))             # sin->arcsin->arccos
            o = jnp.outer(h[:, 0], h[:, 1])                    # torch.outer
            o = jnp.remainder(o, 2.0)                          # torch.remainder(x, 2)
            return jnp.where(o == 0.0, o,
                             jnp.where(o > 0.0, 1.0, 0.0)).astype(jnp.float32)

        return jax.jit(fallback_fn)


def make_preprocess_and_calculate(w, b):
    """Build the model once (mirrors nn.Module __init__).

    w: (3072, 128) f32 = nn.Linear.weight.T, b: (128,) f32.
    Returns forward(x) -> ((B, B) f32, api list)."""
    # Dead-column elimination + device-resident params: slice the two live
    # columns ONCE and keep them in the kernel dtype so per-call HBM traffic is
    # 24 KiB of weight instead of 1.5 MiB (and no per-call astype / slice).
    w2 = jnp.asarray(w, jnp.float32)[:, :KEEP]                 # (3072, 2)
    b2 = jnp.asarray(b, jnp.float32)[:KEEP].reshape(1, KEEP)   # (1, 2)
    used_apis_sorted = sorted(set(USED_APIS), key=USED_APIS.index)

    def forward(x):
        fwd = _build_forward(int(x.shape[0]))
        return fwd(x, w2, b2), used_apis_sorted

    return forward


if __name__ == "__main__":
    key = jax.random.PRNGKey(0)
    kx, kw, kb = jax.random.split(key, 3)

    B = 8
    x = jax.random.normal(kx, (B, 3, 32, 32), dtype=jnp.float32)

    # Deterministic nn.Linear(3072, 128) init (PyTorch-style uniform bounds).
    bound = 1.0 / (IN_FEATURES ** 0.5)
    w_pt = jax.random.uniform(kw, (HIDDEN, IN_FEATURES), jnp.float32, -bound, bound)
    b_pt = jax.random.uniform(kb, (HIDDEN,), jnp.float32, -bound, bound)
    w_kernel = jnp.transpose(w_pt)   # (in_features, out_features) for the kernel

    forward = make_preprocess_and_calculate(w_kernel, b_pt)
    out, apis = forward(x)
    out = jax.block_until_ready(out)

    assert out.shape == (B, B) and out.dtype == jnp.float32
    # heaviside(remainder(., 2), .) can only produce 0.0 or 1.0 here.
    assert bool(jnp.all((out == 0.0) | (out == 1.0)))
    assert len(apis) == 11
    print("KERNEL_OK")
</pallas_src>

<mosaic_0001>
module attributes {stable_mosaic.version = 11 : i64} {
  func.func @_linear_relu_kernel(%arg0: i32, %arg1: memref<8x3072xf32, #tpu.memory_space<vmem>>, %arg2: memref<3072x2xf32, #tpu.memory_space<vmem>>, %arg3: memref<1x2xf32, #tpu.memory_space<vmem>>, %arg4: memref<8x2xf32, #tpu.memory_space<vmem>>) attributes {dimension_semantics = [#tpu.dimension_semantics<arbitrary>], iteration_bounds = array<i64: 1>, scalar_prefetch = 0 : i64, scratch_operands = 0 : i64, tpu.core_type = #tpu.core_type<tc>, window_params = [{pipeline_mode = #tpu.pipeline_mode<synchronous>, transform_indices = @transform_0, window_bounds = array<i64: 8, 3072>}, {pipeline_mode = #tpu.pipeline_mode<synchronous>, transform_indices = @transform_1, window_bounds = array<i64: 3072, 2>}, {pipeline_mode = #tpu.pipeline_mode<synchronous>, transform_indices = @transform_2, window_bounds = array<i64: 1, 2>}, {pipeline_mode = #tpu.pipeline_mode<synchronous>, transform_indices = @transform_3, window_bounds = array<i64: 8, 2>}]} {
    %c0 = arith.constant 0 : index
    %c0_0 = arith.constant 0 : index
    %0 = vector.load %arg1[%c0, %c0_0] : memref<8x3072xf32, #tpu.memory_space<vmem>>, vector<8x3072xf32>
    %c0_1 = arith.constant 0 : index
    %c0_2 = arith.constant 0 : index
    %1 = vector.load %arg2[%c0_1, %c0_2] : memref<3072x2xf32, #tpu.memory_space<vmem>>, vector<3072x2xf32>
    %cst = arith.constant dense<0.000000e+00> : vector<8x2xf32>
    %2 = tpu.matmul %0, %1, %cst {dimension_numbers = #tpu.dot_dimension_numbers<[1], [0], [0], [1], [0, 0, 1, 1], [], []>} : vector<8x3072xf32>, vector<3072x2xf32>, vector<8x2xf32> -> vector<8x2xf32>
    %c0_3 = arith.constant 0 : index
    %c0_4 = arith.constant 0 : index
    %3 = vector.load %arg3[%c0_3, %c0_4] : memref<1x2xf32, #tpu.memory_space<vmem>>, vector<1x2xf32>
    %4 = vector.broadcast %3 : vector<1x2xf32> to vector<8x2xf32>
    %5 = arith.addf %2, %4 : vector<8x2xf32>
    %cst_5 = arith.constant 0.000000e+00 : f32
    %6 = vector.broadcast %cst_5 : f32 to vector<8x2xf32>
    %7 = arith.maximumf %5, %6 : vector<8x2xf32>
    %c0_6 = arith.constant 0 : index
    %c0_7 = arith.constant 0 : index
    %8 = vector.load %arg4[%c0_6, %c0_7] : memref<8x2xf32, #tpu.memory_space<vmem>>, vector<8x2xf32>
    tpu.vector_store %arg4[%c0_6, %c0_7], %7 {strides = array<i32>} : memref<8x2xf32, #tpu.memory_space<vmem>>, vector<8x2xf32>,
    return
  }
  func.func @transform_0(%arg0: i32) -> (i32, i32) {
    %c0_i32 = arith.constant 0 : i32
    %c0_i32_0 = arith.constant 0 : i32
    %c0_i32_1 = arith.constant 0 : i32
    return %c0_i32, %c0_i32_0 : i32, i32
  }
  func.func @transform_1(%arg0: i32) -> (i32, i32) {
    %c0_i32 = arith.constant 0 : i32
    %c0_i32_0 = arith.constant 0 : i32
    %c0_i32_1 = arith.constant 0 : i32
    return %c0_i32, %c0_i32_0 : i32, i32
  }
  func.func @transform_2(%arg0: i32) -> (i32, i32) {
    %c0_i32 = arith.constant 0 : i32
    %c0_i32_0 = arith.constant 0 : i32
    %c0_i32_1 = arith.constant 0 : i32
    return %c0_i32, %c0_i32_0 : i32, i32
  }
  func.func @transform_3(%arg0: i32) -> (i32, i32) {
    %c0_i32 = arith.constant 0 : i32
    %c0_i32_0 = arith.constant 0 : i32
    %c0_i32_1 = arith.constant 0 : i32
    return %c0_i32, %c0_i32_0 : i32, i32
  }
}

</mosaic_0001>

<llo_original>
// kernel: fallback_fn.1
$region0: #{fallback_fn.1}
  #allocation0 [shape = 'u32[]', space=smem, size = 0x4, offset = 0x4, fixed_abs, tag = 'smem constant byte address 0x4 - core index']
  #allocation1 [shape = 'u32[144,128]{1,0:T(1,128)}', space=vmem, size = 0x12000, scoped, tag = 'internal scratch']
  %s0 = inlined_call_operand.vmem [shape: f32[8,3072], index: 0, kind: input, shape index: {}]
  %s1 = inlined_call_operand.vmem [shape: f32[3072,2], index: 1, kind: input, shape index: {}]
  %s2 = inlined_call_operand.vmem [shape: f32[1,2], index: 2, kind: input, shape index: {}]
  %s3 = inlined_call_operand.vmem [shape: f32[8,2], index: 3, kind: output, shape index: {}]
  %s4 = sld [smem:[#allocation0]]
  $region22: #{fallback_fn.1} parent=0
    _
  %s6 = ssub.s32 1, %s4
  %s7 = scalar_select 0, %s6, %s4
  // Predicated region
  $region2: #{fallback_fn.1} parent=0 // pred_check
    _
  $region3: #{fallback_fn.1} parent=0 // pred_check_branch
    %9 = sbr.rel (0) target = $region5
  $region4: #{fallback_fn.1} parent=0 // pred_region
    _
  $region5: #{fallback_fn.1} parent=0 // pred_fallthru
    _
  // Predicated region
  $region6: #{fallback_fn.1} parent=0 // pred_check
    _
  $region7: #{fallback_fn.1} parent=0 // pred_check_branch
    %11 = sbr.rel (0) target = $region9
  $region8: #{fallback_fn.1} parent=0 // pred_region
    _
  $region9: #{fallback_fn.1} parent=0 // pred_fallthru
    _
  // Predicated region
  $region10: #{fallback_fn.1} parent=0 // pred_check
    _
  $region11: #{fallback_fn.1} parent=0 // pred_check_branch
    %13 = sbr.rel (0) target = $region13
  $region12: #{fallback_fn.1} parent=0 // pred_region
    _
  $region13: #{fallback_fn.1} parent=0 // pred_fallthru
    _
  %v14 = vld [vmem:[%s0] sm:$0xff]
  %v15 = vld [vmem:[%s0 + $0x8] sm:$0xff]
  %v16 = vld [vmem:[%s0 + $0x10] sm:$0xff]
  %v17 = vld [vmem:[%s0 + $0x18] sm:$0xff]
  %v18 = vld [vmem:[%s0 + $0x20] sm:$0xff]
  %v19 = vld [vmem:[%s0 + $0x28] sm:$0xff]
  %v20 = vld [vmem:[%s0 + $0x30] sm:$0xff]
  %v21 = vld [vmem:[%s0 + $0x38] sm:$0xff]
  %v22 = vld [vmem:[%s0 + $0x40] sm:$0xff]
  %v23 = vld [vmem:[%s0 + $0x48] sm:$0xff]
  %v24 = vld [vmem:[%s0 + $0x50] sm:$0xff]
  %v25 = vld [vmem:[%s0 + $0x58] sm:$0xff]
  %v26 = vld [vmem:[%s0 + $0x60] sm:$0xff]
  %v27 = vld [vmem:[%s0 + $0x68] sm:$0xff]
  %v28 = vld [vmem:[%s0 + $0x70] sm:$0xff]
  %v29 = vld [vmem:[%s0 + $0x78] sm:$0xff]
  %v30 = vld [vmem:[%s0 + $0x80] sm:$0xff]
  %v31 = vld [vmem:[%s0 + $0x88] sm:$0xff]
  %v32 = vld [vmem:[%s0 + $0x90] sm:$0xff]
  %v33 = vld [vmem:[%s0 + $0x98] sm:$0xff]
  %v34 = vld [vmem:[%s0 + $0xa0] sm:$0xff]
  %v35 = vld [vmem:[%s0 + $0xa8] sm:$0xff]
  %v36 = vld [vmem:[%s0 + $0xb0] sm:$0xff]
  %v37 = vld [vmem:[%s0 + $0xb8] sm:$0xff]
  %v38 = vld [vmem:[%s1] sm:$0xff]
  %v39 = vld [vmem:[%s1 + $0x8] sm:$0xff]
  %v40 = vld [vmem:[%s1 + $0x10] sm:$0xff]
  %v41 = vld [vmem:[%s1 + $0x18] sm:$0xff]
  %v42 = vld [vmem:[%s1 + $0x20] sm:$0xff]
  %v43 = vld [vmem:[%s1 + $0x28] sm:$0xff]
  %v44 = vld [vmem:[%s1 + $0x30] sm:$0xff]
  %v45 = vld [vmem:[%s1 + $0x38] sm:$0xff]
  %v46 = vld [vmem:[%s1 + $0x40] sm:$0xff]
  %v47 = vld [vmem:[%s1 + $0x48] sm:$0xff]
  %v48 = vld [vmem:[%s1 + $0x50] sm:$0xff]
  %v49 = vld [vmem:[%s1 + $0x58] sm:$0xff]
  %v50 = vld [vmem:[%s1 + $0x60] sm:$0xff]
  %v51 = vld [vmem:[%s1 + $0x68] sm:$0xff]
  %v52 = vld [vmem:[%s1 + $0x70] sm:$0xff]
  %v53 = vld [vmem:[%s1 + $0x78] sm:$0xff]
  %v54 = vld [vmem:[%s1 + $0x80] sm:$0xff]
  %v55 = vld [vmem:[%s1 + $0x88] sm:$0xff]
  %v56 = vld [vmem:[%s1 + $0x90] sm:$0xff]
  %v57 = vld [vmem:[%s1 + $0x98] sm:$0xff]
  %v58 = vld [vmem:[%s1 + $0xa0] sm:$0xff]
  %v59 = vld [vmem:[%s1 + $0xa8] sm:$0xff]
  %v60 = vld [vmem:[%s1 + $0xb0] sm:$0xff]
  %v61 = vld [vmem:[%s1 + $0xb8] sm:$0xff]
  %v62 = vld [vmem:[%s1 + $0xc0] sm:$0xff]
  %v63 = vld [vmem:[%s1 + $0xc8] sm:$0xff]
  %v64 = vld [vmem:[%s1 + $0xd0] sm:$0xff]
  %v65 = vld [vmem:[%s1 + $0xd8] sm:$0xff]
  %v66 = vld [vmem:[%s1 + $0xe0] sm:$0xff]
  %v67 = vld [vmem:[%s1 + $0xe8] sm:$0xff]
  %v68 = vld [vmem:[%s1 + $0xf0] sm:$0xff]
  %v69 = vld [vmem:[%s1 + $0xf8] sm:$0xff]
  %v70 = vld [vmem:[%s1 + $0x100] sm:$0xff]
  %v71 = vld [vmem:[%s1 + $0x108] sm:$0xff]
  %v72 = vld [vmem:[%s1 + $0x110] sm:$0xff]
  %v73 = vld [vmem:[%s1 + $0x118] sm:$0xff]
  %v74 = vld [vmem:[%s1 + $0x120] sm:$0xff]
  %v75 = vld [vmem:[%s1 + $0x128] sm:$0xff]
  %v76 = vld [vmem:[%s1 + $0x130] sm:$0xff]
  %v77 = vld [vmem:[%s1 + $0x138] sm:$0xff]
  %v78 = vld [vmem:[%s1 + $0x140] sm:$0xff]
  %v79 = vld [vmem:[%s1 + $0x148] sm:$0xff]
  %v80 = vld [vmem:[%s1 + $0x150] sm:$0xff]
  %v81 = vld [vmem:[%s1 + $0x158] sm:$0xff]
  %v82 = vld [vmem:[%s1 + $0x160] sm:$0xff]
  %v83 = vld [vmem:[%s1 + $0x168] sm:$0xff]
  %v84 = vld [vmem:[%s1 + $0x170] sm:$0xff]
  %v85 = vld [vmem:[%s1 + $0x178] sm:$0xff]
  %v86 = vld [vmem:[%s1 + $0x180] sm:$0xff]
  %v87 = vld [vmem:[%s1 + $0x188] sm:$0xff]
  %v88 = vld [vmem:[%s1 + $0x190] sm:$0xff]
  %v89 = vld [vmem:[%s1 + $0x198] sm:$0xff]
  %v90 = vld [vmem:[%s1 + $0x1a0] sm:$0xff]
  %v91 = vld [vmem:[%s1 + $0x1a8] sm:$0xff]
  %v92 = vld [vmem:[%s1 + $0x1b0] sm:$0xff]
  %v93 = vld [vmem:[%s1 + $0x1b8] sm:$0xff]
  %v94 = vld [vmem:[%s1 + $0x1c0] sm:$0xff]
  %v95 = vld [vmem:[%s1 + $0x1c8] sm:$0xff]
  %v96 = vld [vmem:[%s1 + $0x1d0] sm:$0xff]
  %v97 = vld [vmem:[%s1 + $0x1d8] sm:$0xff]
  %v98 = vld [vmem:[%s1 + $0x1e0] sm:$0xff]
  %v99 = vld [vmem:[%s1 + $0x1e8] sm:$0xff]
  %v100 = vld [vmem:[%s1 + $0x1f0] sm:$0xff]
  %v101 = vld [vmem:[%s1 + $0x1f8] sm:$0xff]
  %v102 = vld [vmem:[%s1 + $0x200] sm:$0xff]
  %v103 = vld [vmem:[%s1 + $0x208] sm:$0xff]
  %v104 = vld [vmem:[%s1 + $0x210] sm:$0xff]
  %v105 = vld [vmem:[%s1 + $0x218] sm:$0xff]
  %v106 = vld [vmem:[%s1 + $0x220] sm:$0xff]
  %v107 = vld [vmem:[%s1 + $0x228] sm:$0xff]
  %v108 = vld [vmem:[%s1 + $0x230] sm:$0xff]
  %v109 = vld [vmem:[%s1 + $0x238] sm:$0xff]
  %v110 = vld [vmem:[%s1 + $0x240] sm:$0xff]
  %v111 = vld [vmem:[%s1 + $0x248] sm:$0xff]
  %v112 = vld [vmem:[%s1 + $0x250] sm:$0xff]
  %v113 = vld [vmem:[%s1 + $0x258] sm:$0xff]
  %v114 = vld [vmem:[%s1 + $0x260] sm:$0xff]
  %v115 = vld [vmem:[%s1 + $0x268] sm:$0xff]
  %v116 = vld [vmem:[%s1 + $0x270] sm:$0xff]
  %v117 = vld [vmem:[%s1 + $0x278] sm:$0xff]
  %v118 = vld [vmem:[%s1 + $0x280] sm:$0xff]
  %v119 = vld [vmem:[%s1 + $0x288] sm:$0xff]
  %v120 = vld [vmem:[%s1 + $0x290] sm:$0xff]
  %v121 = vld [vmem:[%s1 + $0x298] sm:$0xff]
  %v122 = vld [vmem:[%s1 + $0x2a0] sm:$0xff]
  %v123 = vld [vmem:[%s1 + $0x2a8] sm:$0xff]
  %v124 = vld [vmem:[%s1 + $0x2b0] sm:$0xff]
  %v125 = vld [vmem:[%s1 + $0x2b8] sm:$0xff]
  %v126 = vld [vmem:[%s1 + $0x2c0] sm:$0xff]
  %v127 = vld [vmem:[%s1 + $0x2c8] sm:$0xff]
  %v128 = vld [vmem:[%s1 + $0x2d0] sm:$0xff]
  %v129 = vld [vmem:[%s1 + $0x2d8] sm:$0xff]
  %v130 = vld [vmem:[%s1 + $0x2e0] sm:$0xff]
  %v131 = vld [vmem:[%s1 + $0x2e8] sm:$0xff]
  %v132 = vld [vmem:[%s1 + $0x2f0] sm:$0xff]
  %v133 = vld [vmem:[%s1 + $0x2f8] sm:$0xff]
  %v134 = vld [vmem:[%s1 + $0x300] sm:$0xff]
  %v135 = vld [vmem:[%s1 + $0x308] sm:$0xff]
  %v136 = vld [vmem:[%s1 + $0x310] sm:$0xff]
  %v137 = vld [vmem:[%s1 + $0x318] sm:$0xff]
  %v138 = vld [vmem:[%s1 + $0x320] sm:$0xff]
  %v139 = vld [vmem:[%s1 + $0x328] sm:$0xff]
  %v140 = vld [vmem:[%s1 + $0x330] sm:$0xff]
  %v141 = vld [vmem:[%s1 + $0x338] sm:$0xff]
  %v142 = vld [vmem:[%s1 + $0x340] sm:$0xff]
  %v143 = vld [vmem:[%s1 + $0x348] sm:$0xff]
  %v144 = vld [vmem:[%s1 + $0x350] sm:$0xff]
  %v145 = vld [vmem:[%s1 + $0x358] sm:$0xff]
  %v146 = vld [vmem:[%s1 + $0x360] sm:$0xff]
  %v147 = vld [vmem:[%s1 + $0x368] sm:$0xff]
  %v148 = vld [vmem:[%s1 + $0x370] sm:$0xff]
  %v149 = vld [vmem:[%s1 + $0x378] sm:$0xff]
  %v150 = vld [vmem:[%s1 + $0x380] sm:$0xff]
  %v151 = vld [vmem:[%s1 + $0x388] sm:$0xff]
  %v152 = vld [vmem:[%s1 + $0x390] sm:$0xff]
  %v153 = vld [vmem:[%s1 + $0x398] sm:$0xff]
  %v154 = vld [vmem:[%s1 + $0x3a0] sm:$0xff]
  %v155 = vld [vmem:[%s1 + $0x3a8] sm:$0xff]
  %v156 = vld [vmem:[%s1 + $0x3b0] sm:$0xff]
  %v157 = vld [vmem:[%s1 + $0x3b8] sm:$0xff]
  %v158 = vld [vmem:[%s1 + $0x3c0] sm:$0xff]
  %v159 = vld [vmem:[%s1 + $0x3c8] sm:$0xff]
  %v160 = vld [vmem:[%s1 + $0x3d0] sm:$0xff]
  %v161 = vld [vmem:[%s1 + $0x3d8] sm:$0xff]
  %v162 = vld [vmem:[%s1 + $0x3e0] sm:$0xff]
  %v163 = vld [vmem:[%s1 + $0x3e8] sm:$0xff]
  %v164 = vld [vmem:[%s1 + $0x3f0] sm:$0xff]
  %v165 = vld [vmem:[%s1 + $0x3f8] sm:$0xff]
  %v166 = vld [vmem:[%s1 + $0x400] sm:$0xff]
  %v167 = vld [vmem:[%s1 + $0x408] sm:$0xff]
  %v168 = vld [vmem:[%s1 + $0x410] sm:$0xff]
  %v169 = vld [vmem:[%s1 + $0x418] sm:$0xff]
  %v170 = vld [vmem:[%s1 + $0x420] sm:$0xff]
  %v171 = vld [vmem:[%s1 + $0x428] sm:$0xff]
  %v172 = vld [vmem:[%s1 + $0x430] sm:$0xff]
  %v173 = vld [vmem:[%s1 + $0x438] sm:$0xff]
  %v174 = vld [vmem:[%s1 + $0x440] sm:$0xff]
  %v175 = vld [vmem:[%s1 + $0x448] sm:$0xff]
  %v176 = vld [vmem:[%s1 + $0x450] sm:$0xff]
  %v177 = vld [vmem:[%s1 + $0x458] sm:$0xff]
  %v178 = vld [vmem:[%s1 + $0x460] sm:$0xff]
  %v179 = vld [vmem:[%s1 + $0x468] sm:$0xff]
  %v180 = vld [vmem:[%s1 + $0x470] sm:$0xff]
  %v181 = vld [vmem:[%s1 + $0x478] sm:$0xff]
  %v182 = vld [vmem:[%s1 + $0x480] sm:$0xff]
  %v183 = vld [vmem:[%s1 + $0x488] sm:$0xff]
  %v184 = vld [vmem:[%s1 + $0x490] sm:$0xff]
  %v185 = vld [vmem:[%s1 + $0x498] sm:$0xff]
  %v186 = vld [vmem:[%s1 + $0x4a0] sm:$0xff]
  %v187 = vld [vmem:[%s1 + $0x4a8] sm:$0xff]
  %v188 = vld [vmem:[%s1 + $0x4b0] sm:$0xff]
  %v189 = vld [vmem:[%s1 + $0x4b8] sm:$0xff]
  %v190 = vld [vmem:[%s1 + $0x4c0] sm:$0xff]
  %v191 = vld [vmem:[%s1 + $0x4c8] sm:$0xff]
  %v192 = vld [vmem:[%s1 + $0x4d0] sm:$0xff]
  %v193 = vld [vmem:[%s1 + $0x4d8] sm:$0xff]
  %v194 = vld [vmem:[%s1 + $0x4e0] sm:$0xff]
  %v195 = vld [vmem:[%s1 + $0x4e8] sm:$0xff]
  %v196 = vld [vmem:[%s1 + $0x4f0] sm:$0xff]
  %v197 = vld [vmem:[%s1 + $0x4f8] sm:$0xff]
  %v198 = vld [vmem:[%s1 + $0x500] sm:$0xff]
  %v199 = vld [vmem:[%s1 + $0x508] sm:$0xff]
  %v200 = vld [vmem:[%s1 + $0x510] sm:$0xff]
  %v201 = vld [vmem:[%s1 + $0x518] sm:$0xff]
  %v202 = vld [vmem:[%s1 + $0x520] sm:$0xff]
  %v203 = vld [vmem:[%s1 + $0x528] sm:$0xff]
  %v204 = vld [vmem:[%s1 + $0x530] sm:$0xff]
  %v205 = vld [vmem:[%s1 + $0x538] sm:$0xff]
  %v206 = vld [vmem:[%s1 + $0x540] sm:$0xff]
  %v207 = vld [vmem:[%s1 + $0x548] sm:$0xff]
  %v208 = vld [vmem:[%s1 + $0x550] sm:$0xff]
  %v209 = vld [vmem:[%s1 + $0x558] sm:$0xff]
  %v210 = vld [vmem:[%s1 + $0x560] sm:$0xff]
  %v211 = vld [vmem:[%s1 + $0x568] sm:$0xff]
  %v212 = vld [vmem:[%s1 + $0x570] sm:$0xff]
  %v213 = vld [vmem:[%s1 + $0x578] sm:$0xff]
  %v214 = vld [vmem:[%s1 + $0x580] sm:$0xff]
  %v215 = vld [vmem:[%s1 + $0x588] sm:$0xff]
  %v216 = vld [vmem:[%s1 + $0x590] sm:$0xff]
  %v217 = vld [vmem:[%s1 + $0x598] sm:$0xff]
  %v218 = vld [vmem:[%s1 + $0x5a0] sm:$0xff]
  %v219 = vld [vmem:[%s1 + $0x5a8] sm:$0xff]
  %v220 = vld [vmem:[%s1 + $0x5b0] sm:$0xff]
  %v221 = vld [vmem:[%s1 + $0x5b8] sm:$0xff]
  %v222 = vld [vmem:[%s1 + $0x5c0] sm:$0xff]
  %v223 = vld [vmem:[%s1 + $0x5c8] sm:$0xff]
  %v224 = vld [vmem:[%s1 + $0x5d0] sm:$0xff]
  %v225 = vld [vmem:[%s1 + $0x5d8] sm:$0xff]
  %v226 = vld [vmem:[%s1 + $0x5e0] sm:$0xff]
  %v227 = vld [vmem:[%s1 + $0x5e8] sm:$0xff]
  %v228 = vld [vmem:[%s1 + $0x5f0] sm:$0xff]
  %v229 = vld [vmem:[%s1 + $0x5f8] sm:$0xff]
  %v230 = vld [vmem:[%s1 + $0x600] sm:$0xff]
  %v231 = vld [vmem:[%s1 + $0x608] sm:$0xff]
  %v232 = vld [vmem:[%s1 + $0x610] sm:$0xff]
  %v233 = vld [vmem:[%s1 + $0x618] sm:$0xff]
  %v234 = vld [vmem:[%s1 + $0x620] sm:$0xff]
  %v235 = vld [vmem:[%s1 + $0x628] sm:$0xff]
  %v236 = vld [vmem:[%s1 + $0x630] sm:$0xff]
  %v237 = vld [vmem:[%s1 + $0x638] sm:$0xff]
  %v238 = vld [vmem:[%s1 + $0x640] sm:$0xff]
  %v239 = vld [vmem:[%s1 + $0x648] sm:$0xff]
  %v240 = vld [vmem:[%s1 + $0x650] sm:$0xff]
  %v241 = vld [vmem:[%s1 + $0x658] sm:$0xff]
  %v242 = vld [vmem:[%s1 + $0x660] sm:$0xff]
  %v243 = vld [vmem:[%s1 + $0x668] sm:$0xff]
  %v244 = vld [vmem:[%s1 + $0x670] sm:$0xff]
  %v245 = vld [vmem:[%s1 + $0x678] sm:$0xff]
  %v246 = vld [vmem:[%s1 + $0x680] sm:$0xff]
  %v247 = vld [vmem:[%s1 + $0x688] sm:$0xff]
  %v248 = vld [vmem:[%s1 + $0x690] sm:$0xff]
  %v249 = vld [vmem:[%s1 + $0x698] sm:$0xff]
  %v250 = vld [vmem:[%s1 + $0x6a0] sm:$0xff]
  %v251 = vld [vmem:[%s1 + $0x6a8] sm:$0xff]
  %v252 = vld [vmem:[%s1 + $0x6b0] sm:$0xff]
  %v253 = vld [vmem:[%s1 + $0x6b8] sm:$0xff]
  %v254 = vld [vmem:[%s1 + $0x6c0] sm:$0xff]
  %v255 = vld [vmem:[%s1 + $0x6c8] sm:$0xff]
  %v256 = vld [vmem:[%s1 + $0x6d0] sm:$0xff]
  %v257 = vld [vmem:[%s1 + $0x6d8] sm:$0xff]
  %v258 = vld [vmem:[%s1 + $0x6e0] sm:$0xff]
  %v259 = vld [vmem:[%s1 + $0x6e8] sm:$0xff]
  %v260 = vld [vmem:[%s1 + $0x6f0] sm:$0xff]
  %v261 = vld [vmem:[%s1 + $0x6f8] sm:$0xff]
  %v262 = vld [vmem:[%s1 + $0x700] sm:$0xff]
  %v263 = vld [vmem:[%s1 + $0x708] sm:$0xff]
  %v264 = vld [vmem:[%s1 + $0x710] sm:$0xff]
  %v265 = vld [vmem:[%s1 + $0x718] sm:$0xff]
  %v266 = vld [vmem:[%s1 + $0x720] sm:$0xff]
  %v267 = vld [vmem:[%s1 + $0x728] sm:$0xff]
  %v268 = vld [vmem:[%s1 + $0x730] sm:$0xff]
  %v269 = vld [vmem:[%s1 + $0x738] sm:$0xff]
  %v270 = vld [vmem:[%s1 + $0x740] sm:$0xff]
  %v271 = vld [vmem:[%s1 + $0x748] sm:$0xff]
  %v272 = vld [vmem:[%s1 + $0x750] sm:$0xff]
  %v273 = vld [vmem:[%s1 + $0x758] sm:$0xff]
  %v274 = vld [vmem:[%s1 + $0x760] sm:$0xff]
  %v275 = vld [vmem:[%s1 + $0x768] sm:$0xff]
  %v276 = vld [vmem:[%s1 + $0x770] sm:$0xff]
  %v277 = vld [vmem:[%s1 + $0x778] sm:$0xff]
  %v278 = vld [vmem:[%s1 + $0x780] sm:$0xff]
  %v279 = vld [vmem:[%s1 + $0x788] sm:$0xff]
  %v280 = vld [vmem:[%s1 + $0x790] sm:$0xff]
  %v281 = vld [vmem:[%s1 + $0x798] sm:$0xff]
  %v282 = vld [vmem:[%s1 + $0x7a0] sm:$0xff]
  %v283 = vld [vmem:[%s1 + $0x7a8] sm:$0xff]
  %v284 = vld [vmem:[%s1 + $0x7b0] sm:$0xff]
  %v285 = vld [vmem:[%s1 + $0x7b8] sm:$0xff]
  %v286 = vld [vmem:[%s1 + $0x7c0] sm:$0xff]
  %v287 = vld [vmem:[%s1 + $0x7c8] sm:$0xff]
  %v288 = vld [vmem:[%s1 + $0x7d0] sm:$0xff]
  %v289 = vld [vmem:[%s1 + $0x7d8] sm:$0xff]
  %v290 = vld [vmem:[%s1 + $0x7e0] sm:$0xff]
  %v291 = vld [vmem:[%s1 + $0x7e8] sm:$0xff]
  %v292 = vld [vmem:[%s1 + $0x7f0] sm:$0xff]
  %v293 = vld [vmem:[%s1 + $0x7f8] sm:$0xff]
  %v294 = vld [vmem:[%s1 + $0x800] sm:$0xff]
  %v295 = vld [vmem:[%s1 + $0x808] sm:$0xff]
  %v296 = vld [vmem:[%s1 + $0x810] sm:$0xff]
  %v297 = vld [vmem:[%s1 + $0x818] sm:$0xff]
  %v298 = vld [vmem:[%s1 + $0x820] sm:$0xff]
  %v299 = vld [vmem:[%s1 + $0x828] sm:$0xff]
  %v300 = vld [vmem:[%s1 + $0x830] sm:$0xff]
  %v301 = vld [vmem:[%s1 + $0x838] sm:$0xff]
  %v302 = vld [vmem:[%s1 + $0x840] sm:$0xff]
  %v303 = vld [vmem:[%s1 + $0x848] sm:$0xff]
  %v304 = vld [vmem:[%s1 + $0x850] sm:$0xff]
  %v305 = vld [vmem:[%s1 + $0x858] sm:$0xff]
  %v306 = vld [vmem:[%s1 + $0x860] sm:$0xff]
  %v307 = vld [vmem:[%s1 + $0x868] sm:$0xff]
  %v308 = vld [vmem:[%s1 + $0x870] sm:$0xff]
  %v309 = vld [vmem:[%s1 + $0x878] sm:$0xff]
  %v310 = vld [vmem:[%s1 + $0x880] sm:$0xff]
  %v311 = vld [vmem:[%s1 + $0x888] sm:$0xff]
  %v312 = vld [vmem:[%s1 + $0x890] sm:$0xff]
  %v313 = vld [vmem:[%s1 + $0x898] sm:$0xff]
  %v314 = vld [vmem:[%s1 + $0x8a0] sm:$0xff]
  %v315 = vld [vmem:[%s1 + $0x8a8] sm:$0xff]
  %v316 = vld [vmem:[%s1 + $0x8b0] sm:$0xff]
  %v317 = vld [vmem:[%s1 + $0x8b8] sm:$0xff]
  %v318 = vld [vmem:[%s1 + $0x8c0] sm:$0xff]
  %v319 = vld [vmem:[%s1 + $0x8c8] sm:$0xff]
  %v320 = vld [vmem:[%s1 + $0x8d0] sm:$0xff]
  %v321 = vld [vmem:[%s1 + $0x8d8] sm:$0xff]
  %v322 = vld [vmem:[%s1 + $0x8e0] sm:$0xff]
  %v323 = vld [vmem:[%s1 + $0x8e8] sm:$0xff]
  %v324 = vld [vmem:[%s1 + $0x8f0] sm:$0xff]
  %v325 = vld [vmem:[%s1 + $0x8f8] sm:$0xff]
  %v326 = vld [vmem:[%s1 + $0x900] sm:$0xff]
  %v327 = vld [vmem:[%s1 + $0x908] sm:$0xff]
  %v328 = vld [vmem:[%s1 + $0x910] sm:$0xff]
  %v329 = vld [vmem:[%s1 + $0x918] sm:$0xff]
  %v330 = vld [vmem:[%s1 + $0x920] sm:$0xff]
  %v331 = vld [vmem:[%s1 + $0x928] sm:$0xff]
  %v332 = vld [vmem:[%s1 + $0x930] sm:$0xff]
  %v333 = vld [vmem:[%s1 + $0x938] sm:$0xff]
  %v334 = vld [vmem:[%s1 + $0x940] sm:$0xff]
  %v335 = vld [vmem:[%s1 + $0x948] sm:$0xff]
  %v336 = vld [vmem:[%s1 + $0x950] sm:$0xff]
  %v337 = vld [vmem:[%s1 + $0x958] sm:$0xff]
  %v338 = vld [vmem:[%s1 + $0x960] sm:$0xff]
  %v339 = vld [vmem:[%s1 + $0x968] sm:$0xff]
  %v340 = vld [vmem:[%s1 + $0x970] sm:$0xff]
  %v341 = vld [vmem:[%s1 + $0x978] sm:$0xff]
  %v342 = vld [vmem:[%s1 + $0x980] sm:$0xff]
  %v343 = vld [vmem:[%s1 + $0x988] sm:$0xff]
  %v344 = vld [vmem:[%s1 + $0x990] sm:$0xff]
  %v345 = vld [vmem:[%s1 + $0x998] sm:$0xff]
  %v346 = vld [vmem:[%s1 + $0x9a0] sm:$0xff]
  %v347 = vld [vmem:[%s1 + $0x9a8] sm:$0xff]
  %v348 = vld [vmem:[%s1 + $0x9b0] sm:$0xff]
  %v349 = vld [vmem:[%s1 + $0x9b8] sm:$0xff]
  %v350 = vld [vmem:[%s1 + $0x9c0] sm:$0xff]
  %v351 = vld [vmem:[%s1 + $0x9c8] sm:$0xff]
  %v352 = vld [vmem:[%s1 + $0x9d0] sm:$0xff]
  %v353 = vld [vmem:[%s1 + $0x9d8] sm:$0xff]
  %v354 = vld [vmem:[%s1 + $0x9e0] sm:$0xff]
  %v355 = vld [vmem:[%s1 + $0x9e8] sm:$0xff]
  %v356 = vld [vmem:[%s1 + $0x9f0] sm:$0xff]
  %v357 = vld [vmem:[%s1 + $0x9f8] sm:$0xff]
  %v358 = vld [vmem:[%s1 + $0xa00] sm:$0xff]
  %v359 = vld [vmem:[%s1 + $0xa08] sm:$0xff]
  %v360 = vld [vmem:[%s1 + $0xa10] sm:$0xff]
  %v361 = vld [vmem:[%s1 + $0xa18] sm:$0xff]
  %v362 = vld [vmem:[%s1 + $0xa20] sm:$0xff]
  %v363 = vld [vmem:[%s1 + $0xa28] sm:$0xff]
  %v364 = vld [vmem:[%s1 + $0xa30] sm:$0xff]
  %v365 = vld [vmem:[%s1 + $0xa38] sm:$0xff]
  %v366 = vld [vmem:[%s1 + $0xa40] sm:$0xff]
  %v367 = vld [vmem:[%s1 + $0xa48] sm:$0xff]
  %v368 = vld [vmem:[%s1 + $0xa50] sm:$0xff]
  %v369 = vld [vmem:[%s1 + $0xa58] sm:$0xff]
  %v370 = vld [vmem:[%s1 + $0xa60] sm:$0xff]
  %v371 = vld [vmem:[%s1 + $0xa68] sm:$0xff]
  %v372 = vld [vmem:[%s1 + $0xa70] sm:$0xff]
  %v373 = vld [vmem:[%s1 + $0xa78] sm:$0xff]
  %v374 = vld [vmem:[%s1 + $0xa80] sm:$0xff]
  %v375 = vld [vmem:[%s1 + $0xa88] sm:$0xff]
  %v376 = vld [vmem:[%s1 + $0xa90] sm:$0xff]
  %v377 = vld [vmem:[%s1 + $0xa98] sm:$0xff]
  %v378 = vld [vmem:[%s1 + $0xaa0] sm:$0xff]
  %v379 = vld [vmem:[%s1 + $0xaa8] sm:$0xff]
  %v380 = vld [vmem:[%s1 + $0xab0] sm:$0xff]
  %v381 = vld [vmem:[%s1 + $0xab8] sm:$0xff]
  %v382 = vld [vmem:[%s1 + $0xac0] sm:$0xff]
  %v383 = vld [vmem:[%s1 + $0xac8] sm:$0xff]
  %v384 = vld [vmem:[%s1 + $0xad0] sm:$0xff]
  %v385 = vld [vmem:[%s1 + $0xad8] sm:$0xff]
  %v386 = vld [vmem:[%s1 + $0xae0] sm:$0xff]
  %v387 = vld [vmem:[%s1 + $0xae8] sm:$0xff]
  %v388 = vld [vmem:[%s1 + $0xaf0] sm:$0xff]
  %v389 = vld [vmem:[%s1 + $0xaf8] sm:$0xff]
  %v390 = vld [vmem:[%s1 + $0xb00] sm:$0xff]
  %v391 = vld [vmem:[%s1 + $0xb08] sm:$0xff]
  %v392 = vld [vmem:[%s1 + $0xb10] sm:$0xff]
  %v393 = vld [vmem:[%s1 + $0xb18] sm:$0xff]
  %v394 = vld [vmem:[%s1 + $0xb20] sm:$0xff]
  %v395 = vld [vmem:[%s1 + $0xb28] sm:$0xff]
  %v396 = vld [vmem:[%s1 + $0xb30] sm:$0xff]
  %v397 = vld [vmem:[%s1 + $0xb38] sm:$0xff]
  %v398 = vld [vmem:[%s1 + $0xb40] sm:$0xff]
  %v399 = vld [vmem:[%s1 + $0xb48] sm:$0xff]
  %v400 = vld [vmem:[%s1 + $0xb50] sm:$0xff]
  %v401 = vld [vmem:[%s1 + $0xb58] sm:$0xff]
  %v402 = vld [vmem:[%s1 + $0xb60] sm:$0xff]
  %v403 = vld [vmem:[%s1 + $0xb68] sm:$0xff]
  %v404 = vld [vmem:[%s1 + $0xb70] sm:$0xff]
  %v405 = vld [vmem:[%s1 + $0xb78] sm:$0xff]
  %v406 = vld [vmem:[%s1 + $0xb80] sm:$0xff]
  %v407 = vld [vmem:[%s1 + $0xb88] sm:$0xff]
  %v408 = vld [vmem:[%s1 + $0xb90] sm:$0xff]
  %v409 = vld [vmem:[%s1 + $0xb98] sm:$0xff]
  %v410 = vld [vmem:[%s1 + $0xba0] sm:$0xff]
  %v411 = vld [vmem:[%s1 + $0xba8] sm:$0xff]
  %v412 = vld [vmem:[%s1 + $0xbb0] sm:$0xff]
  %v413 = vld [vmem:[%s1 + $0xbb8] sm:$0xff]
  %v414 = vld [vmem:[%s1 + $0xbc0] sm:$0xff]
  %v415 = vld [vmem:[%s1 + $0xbc8] sm:$0xff]
  %v416 = vld [vmem:[%s1 + $0xbd0] sm:$0xff]
  %v417 = vld [vmem:[%s1 + $0xbd8] sm:$0xff]
  %v418 = vld [vmem:[%s1 + $0xbe0] sm:$0xff]
  %v419 = vld [vmem:[%s1 + $0xbe8] sm:$0xff]
  %v420 = vld [vmem:[%s1 + $0xbf0] sm:$0xff]
  %v421 = vld [vmem:[%s1 + $0xbf8] sm:$0xff]
  %v422 = vld [vmem:[%s2] sm:$0x1]
  %v424 = vlaneseq
  %v425 = vshrl.u32 %v424, 7
  %v426 = vsub.s32 0, %v425
  %v427 = vrot.slane %v422, %v426
  %429 = vmatprep.subr.mxu0 0.0
  %430 = vmatpush1.msra.mxu0 %v38
  %431 = vmatprep.subr.mxu0 0.0
  %432 = vmatpush1.msra.mxu0 %v39
  %433 = vmatprep.subr.mxu0 0.0
  %434 = vmatpush1.msra.mxu0 %v40
  %435 = vmatprep.subr.mxu0 0.0
  %436 = vmatpush1.msra.mxu0 %v41
  %437 = vmatprep.subr.mxu0 0.0
  %438 = vmatpush1.msra.mxu0 %v42
  %439 = vmatprep.subr.mxu0 0.0
  %440 = vmatpush1.msra.mxu0 %v43
  %441 = vmatprep.subr.mxu0 0.0
  %442 = vmatpush1.msra.mxu0 %v44
  %443 = vmatprep.subr.mxu0 0.0
  %444 = vmatpush1.msra.mxu0 %v45
  %445 = vmatprep.subr.mxu0 0.0
  %446 = vmatpush1.msra.mxu0 %v46
  %447 = vmatprep.subr.mxu0 0.0
  %448 = vmatpush1.msra.mxu0 %v47
  %449 = vmatprep.subr.mxu0 0.0
  %450 = vmatpush1.msra.mxu0 %v48
  %451 = vmatprep.subr.mxu0 0.0
  %452 = vmatpush1.msra.mxu0 %v49
  %453 = vmatprep.subr.mxu0 0.0
  %454 = vmatpush1.msra.mxu0 %v50
  %455 = vmatprep.subr.mxu0 0.0
  %456 = vmatpush1.msra.mxu0 %v51
  %457 = vmatprep.subr.mxu0 0.0
  %458 = vmatpush1.msra.mxu0 %v52
  %459 = vmatprep.subr.mxu0 0.0
  %460 = vmatpush1.msra.mxu0 %v53
  %461 = vmatprep.subr.mxu0 0.0
  %462 = vmatpush1.msra.mxu0 %v54
  %463 = vmatprep.subr.mxu0 0.0
  %464 = vmatpush1.msra.mxu0 %v55
  %465 = vmatprep.subr.mxu0 0.0
  %466 = vmatpush1.msra.mxu0 %v56
  %467 = vmatprep.subr.mxu0 0.0
  %468 = vmatpush1.msra.mxu0 %v57
  %469 = vmatprep.subr.mxu0 0.0
  %470 = vmatpush1.msra.mxu0 %v58
  %471 = vmatprep.subr.mxu0 0.0
  %472 = vmatpush1.msra.mxu0 %v59
  %473 = vmatprep.subr.mxu0 0.0
  %474 = vmatpush1.msra.mxu0 %v60
  %475 = vmatprep.subr.mxu0 0.0
  %476 = vmatpush1.msra.mxu0 %v61
  %477 = vmatprep.subr.mxu0 0.0
  %478 = vmatpush1.msra.mxu0 %v62
  %479 = vmatprep.subr.mxu0 0.0
  %480 = vmatpush1.msra.mxu0 %v63
  %481 = vmatprep.subr.mxu0 0.0
  %482 = vmatpush1.msra.mxu0 %v64
  %483 = vmatprep.subr.mxu0 0.0
  %484 = vmatpush1.msra.mxu0 %v65
  %485 = vmatprep.subr.mxu0 0.0
  %486 = vmatpush1.msra.mxu0 %v66
  %487 = vmatprep.subr.mxu0 0.0
  %488 = vmatpush1.msra.mxu0 %v67
  %489 = vmatprep.subr.mxu0 0.0
  %490 = vmatpush1.msra.mxu0 %v68
  %491 = vmatprep.subr.mxu0 0.0
  %492 = vmatpush1.msra.mxu0 %v69
  %493 = vmatprep.mubr.f32.mxu0 %v15
  %494 = vmatmul.mubr.f32.gmra.mrb[0].mxu0 %v14
  %v495 = vpop.f32.mrb[0].mxu0
  %v496 = vadd.f32 %v427, %v495
  %v497 = vpop.f32.mrb[0].mxu0
  %498 = vdwg.mxu0
  %499 = vmatprep.subr.mxu0 0.0
  %500 = vmatpush1.msra.mxu0 %v70
  %501 = vmatprep.subr.mxu0 0.0
  %502 = vmatpush1.msra.mxu0 %v71
  %503 = vmatprep.subr.mxu0 0.0
  %504 = vmatpush1.msra.mxu0 %v72
  %505 = vmatprep.subr.mxu0 0.0
  %506 = vmatpush1.msra.mxu0 %v73
  %507 = vmatprep.subr.mxu0 0.0
  %508 = vmatpush1.msra.mxu0 %v74
  %509 = vmatprep.subr.mxu0 0.0
  %510 = vmatpush1.msra.mxu0 %v75
  %511 = vmatprep.subr.mxu0 0.0
  %512 = vmatpush1.msra.mxu0 %v76
  %513 = vmatprep.subr.mxu0 0.0
  %514 = vmatpush1.msra.mxu0 %v77
  %515 = vmatprep.subr.mxu0 0.0
  %516 = vmatpush1.msra.mxu0 %v78
  %517 = vmatprep.subr.mxu0 0.0
  %518 = vmatpush1.msra.mxu0 %v79
  %519 = vmatprep.subr.mxu0 0.0
  %520 = vmatpush1.msra.mxu0 %v80
  %521 = vmatprep.subr.mxu0 0.0
  %522 = vmatpush1.msra.mxu0 %v81
  %523 = vmatprep.subr.mxu0 0.0
  %524 = vmatpush1.msra.mxu0 %v82
  %525 = vmatprep.subr.mxu0 0.0
  %526 = vmatpush1.msra.mxu0 %v83
  %527 = vmatprep.subr.mxu0 0.0
  %528 = vmatpush1.msra.mxu0 %v84
  %529 = vmatprep.subr.mxu0 0.0
  %530 = vmatpush1.msra.mxu0 %v85
  %531 = vmatprep.subr.mxu0 0.0
  %532 = vmatpush1.msra.mxu0 %v86
  %533 = vmatprep.subr.mxu0 0.0
  %534 = vmatpush1.msra.mxu0 %v87
  %535 = vmatprep.subr.mxu0 0.0
  %536 = vmatpush1.msra.mxu0 %v88
  %537 = vmatprep.subr.mxu0 0.0
  %538 = vmatpush1.msra.mxu0 %v89
  %539 = vmatprep.subr.mxu0 0.0
  %540 = vmatpush1.msra.mxu0 %v90
  %541 = vmatprep.subr.mxu0 0.0
  %542 = vmatpush1.msra.mxu0 %v91
  %543 = vmatprep.subr.mxu0 0.0
  %544 = vmatpush1.msra.mxu0 %v92
  %545 = vmatprep.subr.mxu0 0.0
  %546 = vmatpush1.msra.mxu0 %v93
  %547 = vmatprep.subr.mxu0 0.0
  %548 = vmatpush1.msra.mxu0 %v94
  %549 = vmatprep.subr.mxu0 0.0
  %550 = vmatpush1.msra.mxu0 %v95
  %551 = vmatprep.subr.mxu0 0.0
  %552 = vmatpush1.msra.mxu0 %v96
  %553 = vmatprep.subr.mxu0 0.0
  %554 = vmatpush1.msra.mxu0 %v97
  %555 = vmatprep.subr.mxu0 0.0
  %556 = vmatpush1.msra.mxu0 %v98
  %557 = vmatprep.subr.mxu0 0.0
  %558 = vmatpush1.msra.mxu0 %v99
  %559 = vmatprep.subr.mxu0 0.0
  %560 = vmatpush1.msra.mxu0 %v100
  %561 = vmatprep.subr.mxu0 0.0
  %562 = vmatpush1.msra.mxu0 %v101
  %563 = vmatprep.mubr.f32.mxu0 %v17
  %564 = vmatmul.mubr.f32.gmra.mrb[0].mxu0 %v16
  %v565 = vpop.f32.mrb[0].mxu0
  %v566 = vadd.f32 %v496, %v565
  %v567 = vpop.f32.mrb[0].mxu0
  %568 = vdwg.mxu0
  %569 = vmatprep.subr.mxu0 0.0
  %570 = vmatpush1.msra.mxu0 %v102
  %571 = vmatprep.subr.mxu0 0.0
  %572 = vmatpush1.msra.mxu0 %v103
  %573 = vmatprep.subr.mxu0 0.0
  %574 = vmatpush1.msra.mxu0 %v104
  %575 = vmatprep.subr.mxu0 0.0
  %576 = vmatpush1.msra.mxu0 %v105
  %577 = vmatprep.subr.mxu0 0.0
  %578 = vmatpush1.msra.mxu0 %v106
  %579 = vmatprep.subr.mxu0 0.0
  %580 = vmatpush1.msra.mxu0 %v107
  %581 = vmatprep.subr.mxu0 0.0
  %582 = vmatpush1.msra.mxu0 %v108
  %583 = vmatprep.subr.mxu0 0.0
  %584 = vmatpush1.msra.mxu0 %v109
  %585 = vmatprep.subr.mxu0 0.0
  %586 = vmatpush1.msra.mxu0 %v110
  %587 = vmatprep.subr.mxu0 0.0
  %588 = vmatpush1.msra.mxu0 %v111
  %589 = vmatprep.subr.mxu0 0.0
  %590 = vmatpush1.msra.mxu0 %v112
  %591 = vmatprep.subr.mxu0 0.0
  %592 = vmatpush1.msra.mxu0 %v113
  %593 = vmatprep.subr.mxu0 0.0
  %594 = vmatpush1.msra.mxu0 %v114
  %595 = vmatprep.subr.mxu0 0.0
  %596 = vmatpush1.msra.mxu0 %v115
  %597 = vmatprep.subr.mxu0 0.0
  %598 = vmatpush1.msra.mxu0 %v116
  %599 = vmatprep.subr.mxu0 0.0
  %600 = vmatpush1.msra.mxu0 %v117
  %601 = vmatprep.subr.mxu0 0.0
  %602 = vmatpush1.msra.mxu0 %v118
  %603 = vmatprep.subr.mxu0 0.0
  %604 = vmatpush1.msra.mxu0 %v119
  %605 = vmatprep.subr.mxu0 0.0
  %606 = vmatpush1.msra.mxu0 %v120
  %607 = vmatprep.subr.mxu0 0.0
  %608 = vmatpush1.msra.mxu0 %v121
  %609 = vmatprep.subr.mxu0 0.0
  %610 = vmatpush1.msra.mxu0 %v122
  %611 = vmatprep.subr.mxu0 0.0
  %612 = vmatpush1.msra.mxu0 %v123
  %613 = vmatprep.subr.mxu0 0.0
  %614 = vmatpush1.msra.mxu0 %v124
  %615 = vmatprep.subr.mxu0 0.0
  %616 = vmatpush1.msra.mxu0 %v125
  %617 = vmatprep.subr.mxu0 0.0
  %618 = vmatpush1.msra.mxu0 %v126
  %619 = vmatprep.subr.mxu0 0.0
  %620 = vmatpush1.msra.mxu0 %v127
  %621 = vmatprep.subr.mxu0 0.0
  %622 = vmatpush1.msra.mxu0 %v128
  %623 = vmatprep.subr.mxu0 0.0
  %624 = vmatpush1.msra.mxu0 %v129
  %625 = vmatprep.subr.mxu0 0.0
  %626 = vmatpush1.msra.mxu0 %v130
  %627 = vmatprep.subr.mxu0 0.0
  %628 = vmatpush1.msra.mxu0 %v131
  %629 = vmatprep.subr.mxu0 0.0
  %630 = vmatpush1.msra.mxu0 %v132
  %631 = vmatprep.subr.mxu0 0.0
  %632 = vmatpush1.msra.mxu0 %v133
  %633 = vmatprep.mubr.f32.mxu0 %v19
  %634 = vmatmul.mubr.f32.gmra.mrb[0].mxu0 %v18
  %v635 = vpop.f32.mrb[0].mxu0
  %v636 = vadd.f32 %v566, %v635
  %v637 = vpop.f32.mrb[0].mxu0
  %638 = vdwg.mxu0
  %639 = vmatprep.subr.mxu0 0.0
  %640 = vmatpush1.msra.mxu0 %v134
  %641 = vmatprep.subr.mxu0 0.0
  %642 = vmatpush1.msra.mxu0 %v135
  %643 = vmatprep.subr.mxu0 0.0
  %644 = vmatpush1.msra.mxu0 %v136
  %645 = vmatprep.subr.mxu0 0.0
  %646 = vmatpush1.msra.mxu0 %v137
  %647 = vmatprep.subr.mxu0 0.0
  %648 = vmatpush1.msra.mxu0 %v138
  %649 = vmatprep.subr.mxu0 0.0
  %650 = vmatpush1.msra.mxu0 %v139
  %651 = vmatprep.subr.mxu0 0.0
  %652 = vmatpush1.msra.mxu0 %v140
  %653 = vmatprep.subr.mxu0 0.0
  %654 = vmatpush1.msra.mxu0 %v141
  %655 = vmatprep.subr.mxu0 0.0
  %656 = vmatpush1.msra.mxu0 %v142
  %657 = vmatprep.subr.mxu0 0.0
  %658 = vmatpush1.msra.mxu0 %v143
  %659 = vmatprep.subr.mxu0 0.0
  %660 = vmatpush1.msra.mxu0 %v144
  %661 = vmatprep.subr.mxu0 0.0
  %662 = vmatpush1.msra.mxu0 %v145
  %663 = vmatprep.subr.mxu0 0.0
  %664 = vmatpush1.msra.mxu0 %v146
  %665 = vmatprep.subr.mxu0 0.0
  %666 = vmatpush1.msra.mxu0 %v147
  %667 = vmatprep.subr.mxu0 0.0
  %668 = vmatpush1.msra.mxu0 %v148
  %669 = vmatprep.subr.mxu0 0.0
  %670 = vmatpush1.msra.mxu0 %v149
  %671 = vmatprep.subr.mxu0 0.0
  %672 = vmatpush1.msra.mxu0 %v150
  %673 = vmatprep.subr.mxu0 0.0
  %674 = vmatpush1.msra.mxu0 %v151
  %675 = vmatprep.subr.mxu0 0.0
  %676 = vmatpush1.msra.mxu0 %v152
  %677 = vmatprep.subr.mxu0 0.0
  %678 = vmatpush1.msra.mxu0 %v153
  %679 = vmatprep.subr.mxu0 0.0
  %680 = vmatpush1.msra.mxu0 %v154
  %681 = vmatprep.subr.mxu0 0.0
  %682 = vmatpush1.msra.mxu0 %v155
  %683 = vmatprep.subr.mxu0 0.0
  %684 = vmatpush1.msra.mxu0 %v156
  %685 = vmatprep.subr.mxu0 0.0
  %686 = vmatpush1.msra.mxu0 %v157
  %687 = vmatprep.subr.mxu0 0.0
  %688 = vmatpush1.msra.mxu0 %v158
  %689 = vmatprep.subr.mxu0 0.0
  %690 = vmatpush1.msra.mxu0 %v159
  %691 = vmatprep.subr.mxu0 0.0
  %692 = vmatpush1.msra.mxu0 %v160
  %693 = vmatprep.subr.mxu0 0.0
  %694 = vmatpush1.msra.mxu0 %v161
  %695 = vmatprep.subr.mxu0 0.0
  %696 = vmatpush1.msra.mxu0 %v162
  %697 = vmatprep.subr.mxu0 0.0
  %698 = vmatpush1.msra.mxu0 %v163
  %699 = vmatprep.subr.mxu0 0.0
  %700 = vmatpush1.msra.mxu0 %v164
  %701 = vmatprep.subr.mxu0 0.0
  %702 = vmatpush1.msra.mxu0 %v165
  %703 = vmatprep.mubr.f32.mxu0 %v21
  %704 = vmatmul.mubr.f32.gmra.mrb[0].mxu0 %v20
  %v705 = vpop.f32.mrb[0].mxu0
  %v706 = vadd.f32 %v636, %v705
  %v707 = vpop.f32.mrb[0].mxu0
  %708 = vdwg.mxu0
  %709 = vmatprep.subr.mxu0 0.0
  %710 = vmatpush1.msra.mxu0 %v166
  %711 = vmatprep.subr.mxu0 0.0
  %712 = vmatpush1.msra.mxu0 %v167
  %713 = vmatprep.subr.mxu0 0.0
  %714 = vmatpush1.msra.mxu0 %v168
  %715 = vmatprep.subr.mxu0 0.0
  %716 = vmatpush1.msra.mxu0 %v169
  %717 = vmatprep.subr.mxu0 0.0
  %718 = vmatpush1.msra.mxu0 %v170
  %719 = vmatprep.subr.mxu0 0.0
  %720 = vmatpush1.msra.mxu0 %v171
  %721 = vmatprep.subr.mxu0 0.0
  %722 = vmatpush1.msra.mxu0 %v172
  %723 = vmatprep.subr.mxu0 0.0
  %724 = vmatpush1.msra.mxu0 %v173
  %725 = vmatprep.subr.mxu0 0.0
  %726 = vmatpush1.msra.mxu0 %v174
  %727 = vmatprep.subr.mxu0 0.0
  %728 = vmatpush1.msra.mxu0 %v175
  %729 = vmatprep.subr.mxu0 0.0
  %730 = vmatpush1.msra.mxu0 %v176
  %731 = vmatprep.subr.mxu0 0.0
  %732 = vmatpush1.msra.mxu0 %v177
  %733 = vmatprep.subr.mxu0 0.0
  %734 = vmatpush1.msra.mxu0 %v178
  %735 = vmatprep.subr.mxu0 0.0
  %736 = vmatpush1.msra.mxu0 %v179
  %737 = vmatprep.subr.mxu0 0.0
  %738 = vmatpush1.msra.mxu0 %v180
  %739 = vmatprep.subr.mxu0 0.0
  %740 = vmatpush1.msra.mxu0 %v181
  %741 = vmatprep.subr.mxu0 0.0
  %742 = vmatpush1.msra.mxu0 %v182
  %743 = vmatprep.subr.mxu0 0.0
  %744 = vmatpush1.msra.mxu0 %v183
  %745 = vmatprep.subr.mxu0 0.0
  %746 = vmatpush1.msra.mxu0 %v184
  %747 = vmatprep.subr.mxu0 0.0
  %748 = vmatpush1.msra.mxu0 %v185
  %749 = vmatprep.subr.mxu0 0.0
  %750 = vmatpush1.msra.mxu0 %v186
  %751 = vmatprep.subr.mxu0 0.0
  %752 = vmatpush1.msra.mxu0 %v187
  %753 = vmatprep.subr.mxu0 0.0
  %754 = vmatpush1.msra.mxu0 %v188
  %755 = vmatprep.subr.mxu0 0.0
  %756 = vmatpush1.msra.mxu0 %v189
  %757 = vmatprep.subr.mxu0 0.0
  %758 = vmatpush1.msra.mxu0 %v190
  %759 = vmatprep.subr.mxu0 0.0
  %760 = vmatpush1.msra.mxu0 %v191
  %761 = vmatprep.subr.mxu0 0.0
  %762 = vmatpush1.msra.mxu0 %v192
  %763 = vmatprep.subr.mxu0 0.0
  %764 = vmatpush1.msra.mxu0 %v193
  %765 = vmatprep.subr.mxu0 0.0
  %766 = vmatpush1.msra.mxu0 %v194
  %767 = vmatprep.subr.mxu0 0.0
  %768 = vmatpush1.msra.mxu0 %v195
  %769 = vmatprep.subr.mxu0 0.0
  %770 = vmatpush1.msra.mxu0 %v196
  %771 = vmatprep.subr.mxu0 0.0
  %772 = vmatpush1.msra.mxu0 %v197
  %773 = vmatprep.mubr.f32.mxu0 %v23
  %774 = vmatmul.mubr.f32.gmra.mrb[0].mxu0 %v22
  %v775 = vpop.f32.mrb[0].mxu0
  %v776 = vadd.f32 %v706, %v775
  %v777 = vpop.f32.mrb[0].mxu0
  %778 = vdwg.mxu0
  %779 = vmatprep.subr.mxu0 0.0
  %780 = vmatpush1.msra.mxu0 %v198
  %781 = vmatprep.subr.mxu0 0.0
  %782 = vmatpush1.msra.mxu0 %v199
  %783 = vmatprep.subr.mxu0 0.0
  %784 = vmatpush1.msra.mxu0 %v200
  %785 = vmatprep.subr.mxu0 0.0
  %786 = vmatpush1.msra.mxu0 %v201
  %787 = vmatprep.subr.mxu0 0.0
  %788 = vmatpush1.msra.mxu0 %v202
  %789 = vmatprep.subr.mxu0 0.0
  %790 = vmatpush1.msra.mxu0 %v203
  %791 = vmatprep.subr.mxu0 0.0
  %792 = vmatpush1.msra.mxu0 %v204
  %793 = vmatprep.subr.mxu0 0.0
  %794 = vmatpush1.msra.mxu0 %v205
  %795 = vmatprep.subr.mxu0 0.0
  %796 = vmatpush1.msra.mxu0 %v206
  %797 = vmatprep.subr.mxu0 0.0
  %798 = vmatpush1.msra.mxu0 %v207
  %799 = vmatprep.subr.mxu0 0.0
  %800 = vmatpush1.msra.mxu0 %v208
  %801 = vmatprep.subr.mxu0 0.0
  %802 = vmatpush1.msra.mxu0 %v209
  %803 = vmatprep.subr.mxu0 0.0
  %804 = vmatpush1.msra.mxu0 %v210
  %805 = vmatprep.subr.mxu0 0.0
  %806 = vmatpush1.msra.mxu0 %v211
  %807 = vmatprep.subr.mxu0 0.0
  %808 = vmatpush1.msra.mxu0 %v212
  %809 = vmatprep.subr.mxu0 0.0
  %810 = vmatpush1.msra.mxu0 %v213
  %811 = vmatprep.subr.mxu0 0.0
  %812 = vmatpush1.msra.mxu0 %v214
  %813 = vmatprep.subr.mxu0 0.0
  %814 = vmatpush1.msra.mxu0 %v215
  %815 = vmatprep.subr.mxu0 0.0
  %816 = vmatpush1.msra.mxu0 %v216
  %817 = vmatprep.subr.mxu0 0.0
  %818 = vmatpush1.msra.mxu0 %v217
  %819 = vmatprep.subr.mxu0 0.0
  %820 = vmatpush1.msra.mxu0 %v218
  %821 = vmatprep.subr.mxu0 0.0
  %822 = vmatpush1.msra.mxu0 %v219
  %823 = vmatprep.subr.mxu0 0.0
  %824 = vmatpush1.msra.mxu0 %v220
  %825 = vmatprep.subr.mxu0 0.0
  %826 = vmatpush1.msra.mxu0 %v221
  %827 = vmatprep.subr.mxu0 0.0
  %828 = vmatpush1.msra.mxu0 %v222
  %829 = vmatprep.subr.mxu0 0.0
  %830 = vmatpush1.msra.mxu0 %v223
  %831 = vmatprep.subr.mxu0 0.0
  %832 = vmatpush1.msra.mxu0 %v224
  %833 = vmatprep.subr.mxu0 0.0
  %834 = vmatpush1.msra.mxu0 %v225
  %835 = vmatprep.subr.mxu0 0.0
  %836 = vmatpush1.msra.mxu0 %v226
  %837 = vmatprep.subr.mxu0 0.0
  %838 = vmatpush1.msra.mxu0 %v227
  %839 = vmatprep.subr.mxu0 0.0
  %840 = vmatpush1.msra.mxu0 %v228
  %841 = vmatprep.subr.mxu0 0.0
  %842 = vmatpush1.msra.mxu0 %v229
  %843 = vmatprep.mubr.f32.mxu0 %v25
  %844 = vmatmul.mubr.f32.gmra.mrb[0].mxu0 %v24
  %v845 = vpop.f32.mrb[0].mxu0
  %v846 = vadd.f32 %v776, %v845
  %v847 = vpop.f32.mrb[0].mxu0
  %848 = vdwg.mxu0
  %849 = vmatprep.subr.mxu0 0.0
  %850 = vmatpush1.msra.mxu0 %v230
  %851 = vmatprep.subr.mxu0 0.0
  %852 = vmatpush1.msra.mxu0 %v231
  %853 = vmatprep.subr.mxu0 0.0
  %854 = vmatpush1.msra.mxu0 %v232
  %855 = vmatprep.subr.mxu0 0.0
  %856 = vmatpush1.msra.mxu0 %v233
  %857 = vmatprep.subr.mxu0 0.0
  %858 = vmatpush1.msra.mxu0 %v234
  %859 = vmatprep.subr.mxu0 0.0
  %860 = vmatpush1.msra.mxu0 %v235
  %861 = vmatprep.subr.mxu0 0.0
  %862 = vmatpush1.msra.mxu0 %v236
  %863 = vmatprep.subr.mxu0 0.0
  %864 = vmatpush1.msra.mxu0 %v237
  %865 = vmatprep.subr.mxu0 0.0
  %866 = vmatpush1.msra.mxu0 %v238
  %867 = vmatprep.subr.mxu0 0.0
  %868 = vmatpush1.msra.mxu0 %v239
  %869 = vmatprep.subr.mxu0 0.0
  %870 = vmatpush1.msra.mxu0 %v240
  %871 = vmatprep.subr.mxu0 0.0
  %872 = vmatpush1.msra.mxu0 %v241
  %873 = vmatprep.subr.mxu0 0.0
  %874 = vmatpush1.msra.mxu0 %v242
  %875 = vmatprep.subr.mxu0 0.0
  %876 = vmatpush1.msra.mxu0 %v243
  %877 = vmatprep.subr.mxu0 0.0
  %878 = vmatpush1.msra.mxu0 %v244
  %879 = vmatprep.subr.mxu0 0.0
  %880 = vmatpush1.msra.mxu0 %v245
  %881 = vmatprep.subr.mxu0 0.0
  %882 = vmatpush1.msra.mxu0 %v246
  %883 = vmatprep.subr.mxu0 0.0
  %884 = vmatpush1.msra.mxu0 %v247
  %885 = vmatprep.subr.mxu0 0.0
  %886 = vmatpush1.msra.mxu0 %v248
  %887 = vmatprep.subr.mxu0 0.0
  %888 = vmatpush1.msra.mxu0 %v249
  %889 = vmatprep.subr.mxu0 0.0
  %890 = vmatpush1.msra.mxu0 %v250
  %891 = vmatprep.subr.mxu0 0.0
  %892 = vmatpush1.msra.mxu0 %v251
  %893 = vmatprep.subr.mxu0 0.0
  %894 = vmatpush1.msra.mxu0 %v252
  %895 = vmatprep.subr.mxu0 0.0
  %896 = vmatpush1.msra.mxu0 %v253
  %897 = vmatprep.subr.mxu0 0.0
  %898 = vmatpush1.msra.mxu0 %v254
  %899 = vmatprep.subr.mxu0 0.0
  %900 = vmatpush1.msra.mxu0 %v255
  %901 = vmatprep.subr.mxu0 0.0
  %902 = vmatpush1.msra.mxu0 %v256
  %903 = vmatprep.subr.mxu0 0.0
  %904 = vmatpush1.msra.mxu0 %v257
  %905 = vmatprep.subr.mxu0 0.0
  %906 = vmatpush1.msra.mxu0 %v258
  %907 = vmatprep.subr.mxu0 0.0
  %908 = vmatpush1.msra.mxu0 %v259
  %909 = vmatprep.subr.mxu0 0.0
  %910 = vmatpush1.msra.mxu0 %v260
  %911 = vmatprep.subr.mxu0 0.0
  %912 = vmatpush1.msra.mxu0 %v261
  %913 = vmatprep.mubr.f32.mxu0 %v27
  %914 = vmatmul.mubr.f32.gmra.mrb[0].mxu0 %v26
  %v915 = vpop.f32.mrb[0].mxu0
  %v916 = vadd.f32 %v846, %v915
  %v917 = vpop.f32.mrb[0].mxu0
  %918 = vdwg.mxu0
  %919 = vmatprep.subr.mxu0 0.0
  %920 = vmatpush1.msra.mxu0 %v262
  %921 = vmatprep.subr.mxu0 0.0
  %922 = vmatpush1.msra.mxu0 %v263
  %923 = vmatprep.subr.mxu0 0.0
  %924 = vmatpush1.msra.mxu0 %v264
  %925 = vmatprep.subr.mxu0 0.0
  %926 = vmatpush1.msra.mxu0 %v265
  %927 = vmatprep.subr.mxu0 0.0
  %928 = vmatpush1.msra.mxu0 %v266
  %929 = vmatprep.subr.mxu0 0.0
  %930 = vmatpush1.msra.mxu0 %v267
  %931 = vmatprep.subr.mxu0 0.0
  %932 = vmatpush1.msra.mxu0 %v268
  %933 = vmatprep.subr.mxu0 0.0
  %934 = vmatpush1.msra.mxu0 %v269
  %935 = vmatprep.subr.mxu0 0.0
  %936 = vmatpush1.msra.mxu0 %v270
  %937 = vmatprep.subr.mxu0 0.0
  %938 = vmatpush1.msra.mxu0 %v271
  %939 = vmatprep.subr.mxu0 0.0
  %940 = vmatpush1.msra.mxu0 %v272
  %941 = vmatprep.subr.mxu0 0.0
  %942 = vmatpush1.msra.mxu0 %v273
  %943 = vmatprep.subr.mxu0 0.0
  %944 = vmatpush1.msra.mxu0 %v274
  %945 = vmatprep.subr.mxu0 0.0
  %946 = vmatpush1.msra.mxu0 %v275
  %947 = vmatprep.subr.mxu0 0.0
  %948 = vmatpush1.msra.mxu0 %v276
  %949 = vmatprep.subr.mxu0 0.0
  %950 = vmatpush1.msra.mxu0 %v277
  %951 = vmatprep.subr.mxu0 0.0
  %952 = vmatpush1.msra.mxu0 %v278
  %953 = vmatprep.subr.mxu0 0.0
  %954 = vmatpush1.msra.mxu0 %v279
  %955 = vmatprep.subr.mxu0 0.0
  %956 = vmatpush1.msra.mxu0 %v280
  %957 = vmatprep.subr.mxu0 0.0
  %958 = vmatpush1.msra.mxu0 %v281
  %959 = vmatprep.subr.mxu0 0.0
  %960 = vmatpush1.msra.mxu0 %v282
  %961 = vmatprep.subr.mxu0 0.0
  %962 = vmatpush1.msra.mxu0 %v283
  %963 = vmatprep.subr.mxu0 0.0
  %964 = vmatpush1.msra.mxu0 %v284
  %965 = vmatprep.subr.mxu0 0.0
  %966 = vmatpush1.msra.mxu0 %v285
  %967 = vmatprep.subr.mxu0 0.0
  %968 = vmatpush1.msra.mxu0 %v286
  %969 = vmatprep.subr.mxu0 0.0
  %970 = vmatpush1.msra.mxu0 %v287
  %971 = vmatprep.subr.mxu0 0.0
  %972 = vmatpush1.msra.mxu0 %v288
  %973 = vmatprep.subr.mxu0 0.0
  %974 = vmatpush1.msra.mxu0 %v289
  %975 = vmatprep.subr.mxu0 0.0
  %976 = vmatpush1.msra.mxu0 %v290
  %977 = vmatprep.subr.mxu0 0.0
  %978 = vmatpush1.msra.mxu0 %v291
  %979 = vmatprep.subr.mxu0 0.0
  %980 = vmatpush1.msra.mxu0 %v292
  %981 = vmatprep.subr.mxu0 0.0
  %982 = vmatpush1.msra.mxu0 %v293
  %983 = vmatprep.mubr.f32.mxu0 %v29
  %984 = vmatmul.mubr.f32.gmra.mrb[0].mxu0 %v28
  %v985 = vpop.f32.mrb[0].mxu0
  %v986 = vadd.f32 %v916, %v985
  %v987 = vpop.f32.mrb[0].mxu0
  %988 = vdwg.mxu0
  %989 = vmatprep.subr.mxu0 0.0
  %990 = vmatpush1.msra.mxu0 %v294
  %991 = vmatprep.subr.mxu0 0.0
  %992 = vmatpush1.msra.mxu0 %v295
  %993 = vmatprep.subr.mxu0 0.0
  %994 = vmatpush1.msra.mxu0 %v296
  %995 = vmatprep.subr.mxu0 0.0
  %996 = vmatpush1.msra.mxu0 %v297
  %997 = vmatprep.subr.mxu0 0.0
  %998 = vmatpush1.msra.mxu0 %v298
  %999 = vmatprep.subr.mxu0 0.0
  %1000 = vmatpush1.msra.mxu0 %v299
  %1001 = vmatprep.subr.mxu0 0.0
  %1002 = vmatpush1.msra.mxu0 %v300
  %1003 = vmatprep.subr.mxu0 0.0
  %1004 = vmatpush1.msra.mxu0 %v301
  %1005 = vmatprep.subr.mxu0 0.0
  %1006 = vmatpush1.msra.mxu0 %v302
  %1007 = vmatprep.subr.mxu0 0.0
  %1008 = vmatpush1.msra.mxu0 %v303
  %1009 = vmatprep.subr.mxu0 0.0
  %1010 = vmatpush1.msra.mxu0 %v304
  %1011 = vmatprep.subr.mxu0 0.0
  %1012 = vmatpush1.msra.mxu0 %v305
  %1013 = vmatprep.subr.mxu0 0.0
  %1014 = vmatpush1.msra.mxu0 %v306
  %1015 = vmatprep.subr.mxu0 0.0
  %1016 = vmatpush1.msra.mxu0 %v307
  %1017 = vmatprep.subr.mxu0 0.0
  %1018 = vmatpush1.msra.mxu0 %v308
  %1019 = vmatprep.subr.mxu0 0.0
  %1020 = vmatpush1.msra.mxu0 %v309
  %1021 = vmatprep.subr.mxu0 0.0
  %1022 = vmatpush1.msra.mxu0 %v310
  %1023 = vmatprep.subr.mxu0 0.0
  %1024 = vmatpush1.msra.mxu0 %v311
  %1025 = vmatprep.subr.mxu0 0.0
  %1026 = vmatpush1.msra.mxu0 %v312
  %1027 = vmatprep.subr.mxu0 0.0
  %1028 = vmatpush1.msra.mxu0 %v313
  %1029 = vmatprep.subr.mxu0 0.0
  %1030 = vmatpush1.msra.mxu0 %v314
  %1031 = vmatprep.subr.mxu0 0.0
  %1032 = vmatpush1.msra.mxu0 %v315
  %1033 = vmatprep.subr.mxu0 0.0
  %1034 = vmatpush1.msra.mxu0 %v316
  %1035 = vmatprep.subr.mxu0 0.0
  %1036 = vmatpush1.msra.mxu0 %v317
  %1037 = vmatprep.subr.mxu0 0.0
  %1038 = vmatpush1.msra.mxu0 %v318
  %1039 = vmatprep.subr.mxu0 0.0
  %1040 = vmatpush1.msra.mxu0 %v319
  %1041 = vmatprep.subr.mxu0 0.0
  %1042 = vmatpush1.msra.mxu0 %v320
  %1043 = vmatprep.subr.mxu0 0.0
  %1044 = vmatpush1.msra.mxu0 %v321
  %1045 = vmatprep.subr.mxu0 0.0
  %1046 = vmatpush1.msra.mxu0 %v322
  %1047 = vmatprep.subr.mxu0 0.0
  %1048 = vmatpush1.msra.mxu0 %v323
  %1049 = vmatprep.subr.mxu0 0.0
  %1050 = vmatpush1.msra.mxu0 %v324
  %1051 = vmatprep.subr.mxu0 0.0
  %1052 = vmatpush1.msra.mxu0 %v325
  %1053 = vmatprep.mubr.f32.mxu0 %v31
  %1054 = vmatmul.mubr.f32.gmra.mrb[0].mxu0 %v30
  %v1055 = vpop.f32.mrb[0].mxu0
  %v1056 = vadd.f32 %v986, %v1055
  %v1057 = vpop.f32.mrb[0].mxu0
  %1058 = vdwg.mxu0
  %1059 = vmatprep.subr.mxu0 0.0
  %1060 = vmatpush1.msra.mxu0 %v326
  %1061 = vmatprep.subr.mxu0 0.0
  %1062 = vmatpush1.msra.mxu0 %v327
  %1063 = vmatprep.subr.mxu0 0.0
  %1064 = vmatpush1.msra.mxu0 %v328
  %1065 = vmatprep.subr.mxu0 0.0
  %1066 = vmatpush1.msra.mxu0 %v329
  %1067 = vmatprep.subr.mxu0 0.0
  %1068 = vmatpush1.msra.mxu0 %v330
  %1069 = vmatprep.subr.mxu0 0.0
  %1070 = vmatpush1.msra.mxu0 %v331
  %1071 = vmatprep.subr.mxu0 0.0
  %1072 = vmatpush1.msra.mxu0 %v332
  %1073 = vmatprep.subr.mxu0 0.0
  %1074 = vmatpush1.msra.mxu0 %v333
  %1075 = vmatprep.subr.mxu0 0.0
  %1076 = vmatpush1.msra.mxu0 %v334
  %1077 = vmatprep.subr.mxu0 0.0
  %1078 = vmatpush1.msra.mxu0 %v335
  %1079 = vmatprep.subr.mxu0 0.0
  %1080 = vmatpush1.msra.mxu0 %v336
  %1081 = vmatprep.subr.mxu0 0.0
  %1082 = vmatpush1.msra.mxu0 %v337
  %1083 = vmatprep.subr.mxu0 0.0
  %1084 = vmatpush1.msra.mxu0 %v338
  %1085 = vmatprep.subr.mxu0 0.0
  %1086 = vmatpush1.msra.mxu0 %v339
  %1087 = vmatprep.subr.mxu0 0.0
  %1088 = vmatpush1.msra.mxu0 %v340
  %1089 = vmatprep.subr.mxu0 0.0
  %1090 = vmatpush1.msra.mxu0 %v341
  %1091 = vmatprep.subr.mxu0 0.0
  %1092 = vmatpush1.msra.mxu0 %v342
  %1093 = vmatprep.subr.mxu0 0.0
  %1094 = vmatpush1.msra.mxu0 %v343
  %1095 = vmatprep.subr.mxu0 0.0
  %1096 = vmatpush1.msra.mxu0 %v344
  %1097 = vmatprep.subr.mxu0 0.0
  %1098 = vmatpush1.msra.mxu0 %v345
  %1099 = vmatprep.subr.mxu0 0.0
  %1100 = vmatpush1.msra.mxu0 %v346
  %1101 = vmatprep.subr.mxu0 0.0
  %1102 = vmatpush1.msra.mxu0 %v347
  %1103 = vmatprep.subr.mxu0 0.0
  %1104 = vmatpush1.msra.mxu0 %v348
  %1105 = vmatprep.subr.mxu0 0.0
  %1106 = vmatpush1.msra.mxu0 %v349
  %1107 = vmatprep.subr.mxu0 0.0
  %1108 = vmatpush1.msra.mxu0 %v350
  %1109 = vmatprep.subr.mxu0 0.0
  %1110 = vmatpush1.msra.mxu0 %v351
  %1111 = vmatprep.subr.mxu0 0.0
  %1112 = vmatpush1.msra.mxu0 %v352
  %1113 = vmatprep.subr.mxu0 0.0
  %1114 = vmatpush1.msra.mxu0 %v353
  %1115 = vmatprep.subr.mxu0 0.0
  %1116 = vmatpush1.msra.mxu0 %v354
  %1117 = vmatprep.subr.mxu0 0.0
  %1118 = vmatpush1.msra.mxu0 %v355
  %1119 = vmatprep.subr.mxu0 0.0
  %1120 = vmatpush1.msra.mxu0 %v356
  %1121 = vmatprep.subr.mxu0 0.0
  %1122 = vmatpush1.msra.mxu0 %v357
  %1123 = vmatprep.mubr.f32.mxu0 %v33
  %1124 = vmatmul.mubr.f32.gmra.mrb[0].mxu0 %v32
  %v1125 = vpop.f32.mrb[0].mxu0
  %v1126 = vadd.f32 %v1056, %v1125
  %v1127 = vpop.f32.mrb[0].mxu0
  %1128 = vdwg.mxu0
  %1129 = vmatprep.subr.mxu0 0.0
  %1130 = vmatpush1.msra.mxu0 %v358
  %1131 = vmatprep.subr.mxu0 0.0
  %1132 = vmatpush1.msra.mxu0 %v359
  %1133 = vmatprep.subr.mxu0 0.0
  %1134 = vmatpush1.msra.mxu0 %v360
  %1135 = vmatprep.subr.mxu0 0.0
  %1136 = vmatpush1.msra.mxu0 %v361
  %1137 = vmatprep.subr.mxu0 0.0
  %1138 = vmatpush1.msra.mxu0 %v362
  %1139 = vmatprep.subr.mxu0 0.0
  %1140 = vmatpush1.msra.mxu0 %v363
  %1141 = vmatprep.subr.mxu0 0.0
  %1142 = vmatpush1.msra.mxu0 %v364
  %1143 = vmatprep.subr.mxu0 0.0
  %1144 = vmatpush1.msra.mxu0 %v365
  %1145 = vmatprep.subr.mxu0 0.0
  %1146 = vmatpush1.msra.mxu0 %v366
  %1147 = vmatprep.subr.mxu0 0.0
  %1148 = vmatpush1.msra.mxu0 %v367
  %1149 = vmatprep.subr.mxu0 0.0
  %1150 = vmatpush1.msra.mxu0 %v368
  %1151 = vmatprep.subr.mxu0 0.0
  %1152 = vmatpush1.msra.mxu0 %v369
  %1153 = vmatprep.subr.mxu0 0.0
  %1154 = vmatpush1.msra.mxu0 %v370
  %1155 = vmatprep.subr.mxu0 0.0
  %1156 = vmatpush1.msra.mxu0 %v371
  %1157 = vmatprep.subr.mxu0 0.0
  %1158 = vmatpush1.msra.mxu0 %v372
  %1159 = vmatprep.subr.mxu0 0.0
  %1160 = vmatpush1.msra.mxu0 %v373
  %1161 = vmatprep.subr.mxu0 0.0
  %1162 = vmatpush1.msra.mxu0 %v374
  %1163 = vmatprep.subr.mxu0 0.0
  %1164 = vmatpush1.msra.mxu0 %v375
  %1165 = vmatprep.subr.mxu0 0.0
  %1166 = vmatpush1.msra.mxu0 %v376
  %1167 = vmatprep.subr.mxu0 0.0
  %1168 = vmatpush1.msra.mxu0 %v377
  %1169 = vmatprep.subr.mxu0 0.0
  %1170 = vmatpush1.msra.mxu0 %v378
  %1171 = vmatprep.subr.mxu0 0.0
  %1172 = vmatpush1.msra.mxu0 %v379
  %1173 = vmatprep.subr.mxu0 0.0
  %1174 = vmatpush1.msra.mxu0 %v380
  %1175 = vmatprep.subr.mxu0 0.0
  %1176 = vmatpush1.msra.mxu0 %v381
  %1177 = vmatprep.subr.mxu0 0.0
  %1178 = vmatpush1.msra.mxu0 %v382
  %1179 = vmatprep.subr.mxu0 0.0
  %1180 = vmatpush1.msra.mxu0 %v383
  %1181 = vmatprep.subr.mxu0 0.0
  %1182 = vmatpush1.msra.mxu0 %v384
  %1183 = vmatprep.subr.mxu0 0.0
  %1184 = vmatpush1.msra.mxu0 %v385
  %1185 = vmatprep.subr.mxu0 0.0
  %1186 = vmatpush1.msra.mxu0 %v386
  %1187 = vmatprep.subr.mxu0 0.0
  %1188 = vmatpush1.msra.mxu0 %v387
  %1189 = vmatprep.subr.mxu0 0.0
  %1190 = vmatpush1.msra.mxu0 %v388
  %1191 = vmatprep.subr.mxu0 0.0
  %1192 = vmatpush1.msra.mxu0 %v389
  %1193 = vmatprep.mubr.f32.mxu0 %v35
  %1194 = vmatmul.mubr.f32.gmra.mrb[0].mxu0 %v34
  %v1195 = vpop.f32.mrb[0].mxu0
  %v1196 = vadd.f32 %v1126, %v1195
  %v1197 = vpop.f32.mrb[0].mxu0
  %1198 = vdwg.mxu0
  %1199 = vmatprep.subr.mxu0 0.0
  %1200 = vmatpush1.msra.mxu0 %v390
  %1201 = vmatprep.subr.mxu0 0.0
  %1202 = vmatpush1.msra.mxu0 %v391
  %1203 = vmatprep.subr.mxu0 0.0
  %1204 = vmatpush1.msra.mxu0 %v392
  %1205 = vmatprep.subr.mxu0 0.0
  %1206 = vmatpush1.msra.mxu0 %v393
  %1207 = vmatprep.subr.mxu0 0.0
  %1208 = vmatpush1.msra.mxu0 %v394
  %1209 = vmatprep.subr.mxu0 0.0
  %1210 = vmatpush1.msra.mxu0 %v395
  %1211 = vmatprep.subr.mxu0 0.0
  %1212 = vmatpush1.msra.mxu0 %v396
  %1213 = vmatprep.subr.mxu0 0.0
  %1214 = vmatpush1.msra.mxu0 %v397
  %1215 = vmatprep.subr.mxu0 0.0
  %1216 = vmatpush1.msra.mxu0 %v398
  %1217 = vmatprep.subr.mxu0 0.0
  %1218 = vmatpush1.msra.mxu0 %v399
  %1219 = vmatprep.subr.mxu0 0.0
  %1220 = vmatpush1.msra.mxu0 %v400
  %1221 = vmatprep.subr.mxu0 0.0
  %1222 = vmatpush1.msra.mxu0 %v401
  %1223 = vmatprep.subr.mxu0 0.0
  %1224 = vmatpush1.msra.mxu0 %v402
  %1225 = vmatprep.subr.mxu0 0.0
  %1226 = vmatpush1.msra.mxu0 %v403
  %1227 = vmatprep.subr.mxu0 0.0
  %1228 = vmatpush1.msra.mxu0 %v404
  %1229 = vmatprep.subr.mxu0 0.0
  %1230 = vmatpush1.msra.mxu0 %v405
  %1231 = vmatprep.subr.mxu0 0.0
  %1232 = vmatpush1.msra.mxu0 %v406
  %1233 = vmatprep.subr.mxu0 0.0
  %1234 = vmatpush1.msra.mxu0 %v407
  %1235 = vmatprep.subr.mxu0 0.0
  %1236 = vmatpush1.msra.mxu0 %v408
  %1237 = vmatprep.subr.mxu0 0.0
  %1238 = vmatpush1.msra.mxu0 %v409
  %1239 = vmatprep.subr.mxu0 0.0
  %1240 = vmatpush1.msra.mxu0 %v410
  %1241 = vmatprep.subr.mxu0 0.0
  %1242 = vmatpush1.msra.mxu0 %v411
  %1243 = vmatprep.subr.mxu0 0.0
  %1244 = vmatpush1.msra.mxu0 %v412
  %1245 = vmatprep.subr.mxu0 0.0
  %1246 = vmatpush1.msra.mxu0 %v413
  %1247 = vmatprep.subr.mxu0 0.0
  %1248 = vmatpush1.msra.mxu0 %v414
  %1249 = vmatprep.subr.mxu0 0.0
  %1250 = vmatpush1.msra.mxu0 %v415
  %1251 = vmatprep.subr.mxu0 0.0
  %1252 = vmatpush1.msra.mxu0 %v416
  %1253 = vmatprep.subr.mxu0 0.0
  %1254 = vmatpush1.msra.mxu0 %v417
  %1255 = vmatprep.subr.mxu0 0.0
  %1256 = vmatpush1.msra.mxu0 %v418
  %1257 = vmatprep.subr.mxu0 0.0
  %1258 = vmatpush1.msra.mxu0 %v419
  %1259 = vmatprep.subr.mxu0 0.0
  %1260 = vmatpush1.msra.mxu0 %v420
  %1261 = vmatprep.subr.mxu0 0.0
  %1262 = vmatpush1.msra.mxu0 %v421
  %1263 = vmatprep.mubr.f32.mxu0 %v37
  %1264 = vmatmul.mubr.f32.gmra.mrb[0].mxu0 %v36
  %v1265 = vpop.f32.mrb[0].mxu0
  %v1266 = vadd.f32 %v1196, %v1265
  %v1267 = vpop.f32.mrb[0].mxu0
  %1268 = vdwg.mxu0
  %v1269 = vmax.f32 %v1266, 0.0
  %vm1270 = vcmask 15360
  %1271 = vst.msk [vmem:[%s3] sm:$0xff] %vm1270, %v1269
  // Predicated region
  $region14: #{fallback_fn.1} parent=0 // pred_check
    _
  $region15: #{fallback_fn.1} parent=0 // pred_check_branch
    %1273 = sbr.rel (0) target = $region17
  $region16: #{fallback_fn.1} parent=0 // pred_region
    _
  $region17: #{fallback_fn.1} parent=0 // pred_fallthru
    _
  // Predicated region
  $region18: #{fallback_fn.1} parent=0 // pred_check
    _
  $region19: #{fallback_fn.1} parent=0 // pred_check_branch
    %1275 = sbr.rel (0) target = $region21
  $region20: #{fallback_fn.1} parent=0 // pred_region
    _
  $region21: #{fallback_fn.1} parent=0 // pred_fallthru
    _

</llo_original>
